<compile_context>
chip_gen: v7x
topology: tpu7x:2x2x1
jax: 0.10.0
libtpu: 0.0.40
codegen_flags: <defaults>
</compile_context>

<pallas_src>
import math
from functools import partial

import jax
import jax.numpy as jnp
from jax.experimental import pallas as pl
from jax.experimental.pallas import tpu as pltpu


def self_attention_kernel(q_ref, k_ref, v_ref,
                          wq_ref, bq_ref, wk_ref, bk_ref,
                          wv_ref, bv_ref, wo_ref, bo_ref,
                          out_ref, *, compute_dtype):
    """One grid step = (one batch tile, one head)."""
    h = pl.program_id(1)
    bt, S, H = q_ref.shape          # batch tile, seq len, hid_dim
    d = wq_ref.shape[2]             # head_dim
    inv_scale = jnp.float32(1.0 / math.sqrt(d))

    # Fold the batch tile into the matmul M dimension (layout-preserving
    # leading-dim merge).  Operands already arrive in compute_dtype (bf16).
    xq = q_ref[...].reshape(bt * S, H)
    xk = k_ref[...].reshape(bt * S, H)
    xv = v_ref[...].reshape(bt * S, H)

    # Per-head projections: bf16 operands, f32 accumulation, f32 bias add.
    Qh = jnp.dot(xq, wq_ref[0], preferred_element_type=jnp.float32) + bq_ref[0]
    Kh = jnp.dot(xk, wk_ref[0], preferred_element_type=jnp.float32) + bk_ref[0]
    Vh = jnp.dot(xv, wv_ref[0], preferred_element_type=jnp.float32) + bv_ref[0]

    # Fold 1/sqrt(d) into Q once (O(S*d)) instead of scaling each (S,S) tile.
    Qh = Qh * inv_scale

    # (bt*S, d) -> (bt, S, d): leading-dim split only (no lane relayout).
    Qh = Qh.reshape(bt, S, d)
    Kh = Kh.reshape(bt, S, d)
    Vh = Vh.reshape(bt, S, d)

    # Scores: contract d directly (no explicit K transpose / XLU vxpose).
    scores = jnp.einsum("bqd,bkd->bqk",
                        Qh.astype(compute_dtype), Kh.astype(compute_dtype),
                        preferred_element_type=jnp.float32)   # (bt, S, S) f32

    # Numerically stable softmax in f32; normalization deferred to the much
    # smaller context so the divide never touches the (S, S) tile.
    m = jnp.max(scores, axis=-1, keepdims=True)
    e = jnp.exp(scores - m)
    l = jnp.sum(e, axis=-1, keepdims=True)

    ctx = jnp.einsum("bqk,bkd->bqd",
                     e.astype(compute_dtype), Vh.astype(compute_dtype),
                     preferred_element_type=jnp.float32)       # (bt, S, d)
    ctx = ctx * pl.reciprocal(l, approx=True)                  # EUP, not VALU

    # This head's slice of the output projection, accumulated into out_ref.
    part = jnp.dot(ctx.reshape(bt * S, d).astype(compute_dtype),
                   wo_ref[0],
                   preferred_element_type=jnp.float32).reshape(bt, S, H)

    @pl.when(h == 0)
    def _init():
        out_ref[...] = part + bo_ref[...]      # bias added once per batch tile

    @pl.when(h > 0)
    def _accumulate():
        out_ref[...] += part


def self_attention(query, key, value, params, n_heads, *,
                   batch_block=None, compute_dtype=jnp.bfloat16):
    B, S, H = query.shape
    assert H % n_heads == 0
    d = H // n_heads
    wq, bq, wk, bk, wv, bv, wo, bo = params

    if batch_block is None:
        # Fold batch rows into the projection M dim (target ~256 rows/step).
        target = max(1, 256 // S)
        batch_block = 1
        for cand in range(min(B, target), 0, -1):
            if B % cand == 0:
                batch_block = cand
                break
    bt = batch_block
    assert B % bt == 0

    # One-time (outside-kernel) re-layout + downcast of parameters and
    # activations: every per-head weight/bias block has full trailing dims
    # (no sub-128-lane BlockSpecs) and every MXU operand enters the kernel in
    # compute_dtype (halves DMA, no in-kernel casts).  Biases stay f32: they
    # are added to f32 accumulators.
    cd = compute_dtype
    q_c = query.astype(cd)
    k_c = key.astype(cd)
    v_c = value.astype(cd)
    wq_h = wq.reshape(H, n_heads, d).transpose(1, 0, 2).astype(cd)   # (nh, H, d)
    wk_h = wk.reshape(H, n_heads, d).transpose(1, 0, 2).astype(cd)
    wv_h = wv.reshape(H, n_heads, d).transpose(1, 0, 2).astype(cd)
    bq_h = bq.reshape(n_heads, 1, d).astype(jnp.float32)             # (nh, 1, d)
    bk_h = bk.reshape(n_heads, 1, d).astype(jnp.float32)
    bv_h = bv.reshape(n_heads, 1, d).astype(jnp.float32)
    wo_h = wo.reshape(n_heads, d, H).astype(cd)                      # (nh, d, H)
    bo_f = bo.astype(jnp.float32)

    seq_spec = pl.BlockSpec((bt, S, H), lambda b, h: (b, 0, 0))
    wqkv_spec = pl.BlockSpec((1, H, d), lambda b, h: (h, 0, 0))
    bqkv_spec = pl.BlockSpec((1, 1, d), lambda b, h: (h, 0, 0))
    wo_spec = pl.BlockSpec((1, d, H), lambda b, h: (h, 0, 0))
    bo_spec = pl.BlockSpec((1, H), lambda b, h: (0, 0))
    out_spec = pl.BlockSpec((bt, S, H), lambda b, h: (b, 0, 0))

    kern = partial(self_attention_kernel, compute_dtype=cd)

    return pl.pallas_call(
        kern,
        out_shape=jax.ShapeDtypeStruct((B, S, H), jnp.float32),
        grid=(B // bt, n_heads),
        in_specs=[seq_spec, seq_spec, seq_spec,
                  wqkv_spec, bqkv_spec, wqkv_spec, bqkv_spec,
                  wqkv_spec, bqkv_spec, wo_spec, bo_spec],
        out_specs=out_spec,
        compiler_params=pltpu.CompilerParams(
            dimension_semantics=("parallel", "arbitrary")),
    )(q_c, k_c, v_c,
      wq_h, bq_h, wk_h, bk_h, wv_h, bv_h, wo_h, bo_f)


def reference(query, key, value, params, n_heads):
    # Pure-JAX f32 reference replicating the PyTorch forward (dropout = id).
    B, S, H = query.shape
    d = H // n_heads
    wq, bq, wk, bk, wv, bv, wo, bo = params
    Q = query @ wq + bq
    K = key @ wk + bk
    V = value @ wv + bv
    Q = Q.reshape(B, S, n_heads, d).transpose(0, 2, 1, 3)
    K = K.reshape(B, S, n_heads, d).transpose(0, 2, 1, 3)
    V = V.reshape(B, S, n_heads, d).transpose(0, 2, 1, 3)
    energy = jnp.einsum("bhqd,bhkd->bhqk", Q, K) / jnp.sqrt(jnp.float32(d))
    attn = jax.nn.softmax(energy, axis=-1)
    x = jnp.einsum("bhqk,bhkd->bhqd", attn, V)
    x = x.transpose(0, 2, 1, 3).reshape(B, S, H)
    return x @ wo + bo


if __name__ == "__main__":
    B, S, H, n_heads = 2, 8, 32, 4

    key0 = jax.random.PRNGKey(0)
    ks = jax.random.split(key0, 11)
    bound = 1.0 / math.sqrt(H)

    def u(k, shape):
        return jax.random.uniform(k, shape, jnp.float32, -bound, bound)

    # Linear params stored as [in, out]; biases as [1, out].
    wq, wk, wv, wo = (u(ks[0], (H, H)), u(ks[1], (H, H)),
                      u(ks[2], (H, H)), u(ks[3], (H, H)))
    bq, bk, bv, bo = (u(ks[4], (1, H)), u(ks[5], (1, H)),
                      u(ks[6], (1, H)), u(ks[7], (1, H)))
    params = (wq, bq, wk, bk, wv, bv, wo, bo)

    query = jax.random.normal(ks[8], (B, S, H), jnp.float32)
    keyx = jax.random.normal(ks[9], (B, S, H), jnp.float32)
    value = jax.random.normal(ks[10], (B, S, H), jnp.float32)

    out = self_attention(query, keyx, value, params, n_heads)
    out = jax.block_until_ready(out)

    ref = reference(query, keyx, value, params, n_heads)
    assert out.shape == (B, S, H)
    # bf16 MXU operands + approx reciprocal -> relaxed tolerance vs f32 ref.
    assert jnp.allclose(out, ref, atol=3e-2, rtol=3e-2), "mismatch vs reference"

    print("KERNEL_OK")
</pallas_src>

<mosaic_0001>
module attributes {stable_mosaic.version = 11 : i64} {
  func.func @self_attention_kernel(%arg0: i32, %arg1: i32, %arg2: memref<2x8x32xbf16, #tpu.memory_space<vmem>>, %arg3: memref<2x8x32xbf16, #tpu.memory_space<vmem>>, %arg4: memref<2x8x32xbf16, #tpu.memory_space<vmem>>, %arg5: memref<1x32x8xbf16, #tpu.memory_space<vmem>>, %arg6: memref<1x1x8xf32, #tpu.memory_space<vmem>>, %arg7: memref<1x32x8xbf16, #tpu.memory_space<vmem>>, %arg8: memref<1x1x8xf32, #tpu.memory_space<vmem>>, %arg9: memref<1x32x8xbf16, #tpu.memory_space<vmem>>, %arg10: memref<1x1x8xf32, #tpu.memory_space<vmem>>, %arg11: memref<1x8x32xbf16, #tpu.memory_space<vmem>>, %arg12: memref<1x32xf32, #tpu.memory_space<vmem>>, %arg13: memref<2x8x32xf32, #tpu.memory_space<vmem>>) attributes {dimension_semantics = [#tpu.dimension_semantics<parallel>, #tpu.dimension_semantics<arbitrary>], iteration_bounds = array<i64: 1, 4>, scalar_prefetch = 0 : i64, scratch_operands = 0 : i64, tpu.core_type = #tpu.core_type<tc>, window_params = [{transform_indices = @transform_0, window_bounds = array<i64: 2, 8, 32>}, {transform_indices = @transform_1, window_bounds = array<i64: 2, 8, 32>}, {transform_indices = @transform_2, window_bounds = array<i64: 2, 8, 32>}, {transform_indices = @transform_3, window_bounds = array<i64: 1, 32, 8>}, {transform_indices = @transform_4, window_bounds = array<i64: 1, 1, 8>}, {transform_indices = @transform_5, window_bounds = array<i64: 1, 32, 8>}, {transform_indices = @transform_6, window_bounds = array<i64: 1, 1, 8>}, {transform_indices = @transform_7, window_bounds = array<i64: 1, 32, 8>}, {transform_indices = @transform_8, window_bounds = array<i64: 1, 1, 8>}, {transform_indices = @transform_9, window_bounds = array<i64: 1, 8, 32>}, {pipeline_mode = #tpu.pipeline_mode<synchronous>, transform_indices = @transform_10, window_bounds = array<i64: 1, 32>}, {transform_indices = @transform_11, window_bounds = array<i64: 2, 8, 32>}]} {
    %c0 = arith.constant 0 : index
    %c0_0 = arith.constant 0 : index
    %c0_1 = arith.constant 0 : index
    %0 = vector.load %arg2[%c0, %c0_0, %c0_1] : memref<2x8x32xbf16, #tpu.memory_space<vmem>>, vector<2x8x32xbf16>
    %1 = vector.shape_cast %0 : vector<2x8x32xbf16> to vector<16x32xbf16>
    %c0_2 = arith.constant 0 : index
    %c0_3 = arith.constant 0 : index
    %c0_4 = arith.constant 0 : index
    %2 = vector.load %arg3[%c0_2, %c0_3, %c0_4] : memref<2x8x32xbf16, #tpu.memory_space<vmem>>, vector<2x8x32xbf16>
    %3 = vector.shape_cast %2 : vector<2x8x32xbf16> to vector<16x32xbf16>
    %c0_5 = arith.constant 0 : index
    %c0_6 = arith.constant 0 : index
    %c0_7 = arith.constant 0 : index
    %4 = vector.load %arg4[%c0_5, %c0_6, %c0_7] : memref<2x8x32xbf16, #tpu.memory_space<vmem>>, vector<2x8x32xbf16>
    %5 = vector.shape_cast %4 : vector<2x8x32xbf16> to vector<16x32xbf16>
    %c0_8 = arith.constant 0 : index
    %c0_9 = arith.constant 0 : index
    %c0_10 = arith.constant 0 : index
    %6 = vector.load %arg5[%c0_8, %c0_9, %c0_10] : memref<1x32x8xbf16, #tpu.memory_space<vmem>>, vector<1x32x8xbf16>
    %7 = vector.shape_cast %6 : vector<1x32x8xbf16> to vector<32x8xbf16>
    %cst = arith.constant dense<0.000000e+00> : vector<16x8xf32>
    %8 = tpu.matmul %1, %7, %cst {dimension_numbers = #tpu.dot_dimension_numbers<[1], [0], [0], [1], [0, 0, 1, 1], [], []>} : vector<16x32xbf16>, vector<32x8xbf16>, vector<16x8xf32> -> vector<16x8xf32>
    %c0_11 = arith.constant 0 : index
    %c0_12 = arith.constant 0 : index
    %c0_13 = arith.constant 0 : index
    %9 = vector.load %arg6[%c0_11, %c0_12, %c0_13] : memref<1x1x8xf32, #tpu.memory_space<vmem>>, vector<1x1x8xf32>
    %10 = vector.shape_cast %9 : vector<1x1x8xf32> to vector<1x8xf32>
    %11 = vector.broadcast %10 : vector<1x8xf32> to vector<16x8xf32>
    %12 = arith.addf %8, %11 : vector<16x8xf32>
    %c0_14 = arith.constant 0 : index
    %c0_15 = arith.constant 0 : index
    %c0_16 = arith.constant 0 : index
    %13 = vector.load %arg7[%c0_14, %c0_15, %c0_16] : memref<1x32x8xbf16, #tpu.memory_space<vmem>>, vector<1x32x8xbf16>
    %14 = vector.shape_cast %13 : vector<1x32x8xbf16> to vector<32x8xbf16>
    %cst_17 = arith.constant dense<0.000000e+00> : vector<16x8xf32>
    %15 = tpu.matmul %3, %14, %cst_17 {dimension_numbers = #tpu.dot_dimension_numbers<[1], [0], [0], [1], [0, 0, 1, 1], [], []>} : vector<16x32xbf16>, vector<32x8xbf16>, vector<16x8xf32> -> vector<16x8xf32>
    %c0_18 = arith.constant 0 : index
    %c0_19 = arith.constant 0 : index
    %c0_20 = arith.constant 0 : index
    %16 = vector.load %arg8[%c0_18, %c0_19, %c0_20] : memref<1x1x8xf32, #tpu.memory_space<vmem>>, vector<1x1x8xf32>
    %17 = vector.shape_cast %16 : vector<1x1x8xf32> to vector<1x8xf32>
    %18 = vector.broadcast %17 : vector<1x8xf32> to vector<16x8xf32>
    %19 = arith.addf %15, %18 : vector<16x8xf32>
    %c0_21 = arith.constant 0 : index
    %c0_22 = arith.constant 0 : index
    %c0_23 = arith.constant 0 : index
    %20 = vector.load %arg9[%c0_21, %c0_22, %c0_23] : memref<1x32x8xbf16, #tpu.memory_space<vmem>>, vector<1x32x8xbf16>
    %21 = vector.shape_cast %20 : vector<1x32x8xbf16> to vector<32x8xbf16>
    %cst_24 = arith.constant dense<0.000000e+00> : vector<16x8xf32>
    %22 = tpu.matmul %5, %21, %cst_24 {dimension_numbers = #tpu.dot_dimension_numbers<[1], [0], [0], [1], [0, 0, 1, 1], [], []>} : vector<16x32xbf16>, vector<32x8xbf16>, vector<16x8xf32> -> vector<16x8xf32>
    %c0_25 = arith.constant 0 : index
    %c0_26 = arith.constant 0 : index
    %c0_27 = arith.constant 0 : index
    %23 = vector.load %arg10[%c0_25, %c0_26, %c0_27] : memref<1x1x8xf32, #tpu.memory_space<vmem>>, vector<1x1x8xf32>
    %24 = vector.shape_cast %23 : vector<1x1x8xf32> to vector<1x8xf32>
    %25 = vector.broadcast %24 : vector<1x8xf32> to vector<16x8xf32>
    %26 = arith.addf %22, %25 : vector<16x8xf32>
    %cst_28 = arith.constant 0.353553385 : f32
    %27 = vector.broadcast %cst_28 : f32 to vector<16x8xf32>
    %28 = arith.mulf %12, %27 : vector<16x8xf32>
    %29 = vector.shape_cast %28 : vector<16x8xf32> to vector<2x8x8xf32>
    %30 = vector.shape_cast %19 : vector<16x8xf32> to vector<2x8x8xf32>
    %31 = vector.shape_cast %26 : vector<16x8xf32> to vector<2x8x8xf32>
    %32 = arith.truncf %29 : vector<2x8x8xf32> to vector<2x8x8xbf16>
    %33 = arith.truncf %30 : vector<2x8x8xf32> to vector<2x8x8xbf16>
    "tpu.trace_start"() <{level = 10 : i32, message = "bqd,bkd->bqk"}> : () -> ()
    %cst_29 = arith.constant dense<0.000000e+00> : vector<2x8x8xf32>
    %34 = tpu.matmul %32, %33, %cst_29 {dimension_numbers = #tpu.dot_dimension_numbers<[2], [2], [1], [1], [0, 0, 0, 1, 1, 1], [0], [0]>} : vector<2x8x8xbf16>, vector<2x8x8xbf16>, vector<2x8x8xf32> -> vector<2x8x8xf32>
    "tpu.trace_stop"() : () -> ()
    %cst_30 = arith.constant dense<0xFF800000> : vector<2x8xf32>
    %35 = vector.multi_reduction <maximumf>, %34, %cst_30 [2] : vector<2x8x8xf32> to vector<2x8xf32>
    %36 = vector.shape_cast %35 : vector<2x8xf32> to vector<2x8x1xf32>
    %37 = vector.broadcast %36 : vector<2x8x1xf32> to vector<2x8x8xf32>
    %38 = arith.subf %34, %37 : vector<2x8x8xf32>
    %39 = math.exp %38 : vector<2x8x8xf32>
    %cst_31 = arith.constant dense<0.000000e+00> : vector<2x8xf32>
    %40 = vector.multi_reduction <add>, %39, %cst_31 [2] : vector<2x8x8xf32> to vector<2x8xf32>
    %41 = vector.shape_cast %40 : vector<2x8xf32> to vector<2x8x1xf32>
    %42 = arith.truncf %39 : vector<2x8x8xf32> to vector<2x8x8xbf16>
    %43 = arith.truncf %31 : vector<2x8x8xf32> to vector<2x8x8xbf16>
    "tpu.trace_start"() <{level = 10 : i32, message = "bqk,bkd->bqd"}> : () -> ()
    %cst_32 = arith.constant dense<0.000000e+00> : vector<2x8x8xf32>
    %44 = tpu.matmul %42, %43, %cst_32 {dimension_numbers = #tpu.dot_dimension_numbers<[2], [1], [1], [2], [0, 0, 0, 1, 1, 2], [0], [0]>} : vector<2x8x8xbf16>, vector<2x8x8xbf16>, vector<2x8x8xf32> -> vector<2x8x8xf32>
    "tpu.trace_stop"() : () -> ()
    %45 = tpu.reciprocal %41 {approx = true} : vector<2x8x1xf32> -> vector<2x8x1xf32>
    %46 = vector.broadcast %45 : vector<2x8x1xf32> to vector<2x8x8xf32>
    %47 = arith.mulf %44, %46 : vector<2x8x8xf32>
    %48 = vector.shape_cast %47 : vector<2x8x8xf32> to vector<16x8xf32>
    %49 = arith.truncf %48 : vector<16x8xf32> to vector<16x8xbf16>
    %c0_33 = arith.constant 0 : index
    %c0_34 = arith.constant 0 : index
    %c0_35 = arith.constant 0 : index
    %50 = vector.load %arg11[%c0_33, %c0_34, %c0_35] : memref<1x8x32xbf16, #tpu.memory_space<vmem>>, vector<1x8x32xbf16>
    %51 = vector.shape_cast %50 : vector<1x8x32xbf16> to vector<8x32xbf16>
    %cst_36 = arith.constant dense<0.000000e+00> : vector<16x32xf32>
    %52 = tpu.matmul %49, %51, %cst_36 {dimension_numbers = #tpu.dot_dimension_numbers<[1], [0], [0], [1], [0, 0, 1, 1], [], []>} : vector<16x8xbf16>, vector<8x32xbf16>, vector<16x32xf32> -> vector<16x32xf32>
    %53 = vector.shape_cast %52 : vector<16x32xf32> to vector<2x8x32xf32>
    %c0_i32 = arith.constant 0 : i32
    %54 = arith.cmpi eq, %arg1, %c0_i32 : i32
    %55 = arith.extui %54 : i1 to i32
    %c0_i32_37 = arith.constant 0 : i32
    %56 = arith.cmpi ne, %55, %c0_i32_37 : i32
    scf.if %56 {
      %c0_40 = arith.constant 0 : index
      %c0_41 = arith.constant 0 : index
      %60 = vector.load %arg12[%c0_40, %c0_41] : memref<1x32xf32, #tpu.memory_space<vmem>>, vector<1x32xf32>
      %61 = vector.shape_cast %60 : vector<1x32xf32> to vector<1x1x32xf32>
      %62 = vector.broadcast %61 : vector<1x1x32xf32> to vector<2x8x32xf32>
      %63 = arith.addf %53, %62 : vector<2x8x32xf32>
      %c0_42 = arith.constant 0 : index
      %c0_43 = arith.constant 0 : index
      %c0_44 = arith.constant 0 : index
      %64 = vector.load %arg13[%c0_42, %c0_43, %c0_44] : memref<2x8x32xf32, #tpu.memory_space<vmem>>, vector<2x8x32xf32>
      tpu.vector_store %arg13[%c0_42, %c0_43, %c0_44], %63 {strides = array<i32>} : memref<2x8x32xf32, #tpu.memory_space<vmem>>, vector<2x8x32xf32>,
    } else {
    }
    %c0_i32_38 = arith.constant 0 : i32
    %57 = arith.cmpi sgt, %arg1, %c0_i32_38 : i32
    %58 = arith.extui %57 : i1 to i32
    %c0_i32_39 = arith.constant 0 : i32
    %59 = arith.cmpi ne, %58, %c0_i32_39 : i32
    scf.if %59 {
      %c0_40 = arith.constant 0 : index
      %c0_41 = arith.constant 0 : index
      %c0_42 = arith.constant 0 : index
      %60 = vector.load %arg13[%c0_40, %c0_41, %c0_42] : memref<2x8x32xf32, #tpu.memory_space<vmem>>, vector<2x8x32xf32>
      %61 = arith.addf %60, %53 : vector<2x8x32xf32>
      %c0_43 = arith.constant 0 : index
      %c0_44 = arith.constant 0 : index
      %c0_45 = arith.constant 0 : index
      %62 = vector.load %arg13[%c0_43, %c0_44, %c0_45] : memref<2x8x32xf32, #tpu.memory_space<vmem>>, vector<2x8x32xf32>
      tpu.vector_store %arg13[%c0_43, %c0_44, %c0_45], %61 {strides = array<i32>} : memref<2x8x32xf32, #tpu.memory_space<vmem>>, vector<2x8x32xf32>,
    } else {
    }
    return
  }
  func.func @transform_0(%arg0: i32, %arg1: i32) -> (i32, i32, i32) {
    %c0_i32 = arith.constant 0 : i32
    %c0_i32_0 = arith.constant 0 : i32
    %c0_i32_1 = arith.constant 0 : i32
    return %arg0, %c0_i32, %c0_i32_0 : i32, i32, i32
  }
  func.func @transform_1(%arg0: i32, %arg1: i32) -> (i32, i32, i32) {
    %c0_i32 = arith.constant 0 : i32
    %c0_i32_0 = arith.constant 0 : i32
    %c0_i32_1 = arith.constant 0 : i32
    return %arg0, %c0_i32, %c0_i32_0 : i32, i32, i32
  }
  func.func @transform_2(%arg0: i32, %arg1: i32) -> (i32, i32, i32) {
    %c0_i32 = arith.constant 0 : i32
    %c0_i32_0 = arith.constant 0 : i32
    %c0_i32_1 = arith.constant 0 : i32
    return %arg0, %c0_i32, %c0_i32_0 : i32, i32, i32
  }
  func.func @transform_3(%arg0: i32, %arg1: i32) -> (i32, i32, i32) {
    %c0_i32 = arith.constant 0 : i32
    %c0_i32_0 = arith.constant 0 : i32
    %c0_i32_1 = arith.constant 0 : i32
    return %arg1, %c0_i32, %c0_i32_0 : i32, i32, i32
  }
  func.func @transform_4(%arg0: i32, %arg1: i32) -> (i32, i32, i32) {
    %c0_i32 = arith.constant 0 : i32
    %c0_i32_0 = arith.constant 0 : i32
    %c0_i32_1 = arith.constant 0 : i32
    return %arg1, %c0_i32, %c0_i32_0 : i32, i32, i32
  }
  func.func @transform_5(%arg0: i32, %arg1: i32) -> (i32, i32, i32) {
    %c0_i32 = arith.constant 0 : i32
    %c0_i32_0 = arith.constant 0 : i32
    %c0_i32_1 = arith.constant 0 : i32
    return %arg1, %c0_i32, %c0_i32_0 : i32, i32, i32
  }
  func.func @transform_6(%arg0: i32, %arg1: i32) -> (i32, i32, i32) {
    %c0_i32 = arith.constant 0 : i32
    %c0_i32_0 = arith.constant 0 : i32
    %c0_i32_1 = arith.constant 0 : i32
    return %arg1, %c0_i32, %c0_i32_0 : i32, i32, i32
  }
  func.func @transform_7(%arg0: i32, %arg1: i32) -> (i32, i32, i32) {
    %c0_i32 = arith.constant 0 : i32
    %c0_i32_0 = arith.constant 0 : i32
    %c0_i32_1 = arith.constant 0 : i32
    return %arg1, %c0_i32, %c0_i32_0 : i32, i32, i32
  }
  func.func @transform_8(%arg0: i32, %arg1: i32) -> (i32, i32, i32) {
    %c0_i32 = arith.constant 0 : i32
    %c0_i32_0 = arith.constant 0 : i32
    %c0_i32_1 = arith.constant 0 : i32
    return %arg1, %c0_i32, %c0_i32_0 : i32, i32, i32
  }
  func.func @transform_9(%arg0: i32, %arg1: i32) -> (i32, i32, i32) {
    %c0_i32 = arith.constant 0 : i32
    %c0_i32_0 = arith.constant 0 : i32
    %c0_i32_1 = arith.constant 0 : i32
    return %arg1, %c0_i32, %c0_i32_0 : i32, i32, i32
  }
  func.func @transform_10(%arg0: i32, %arg1: i32) -> (i32, i32) {
    %c0_i32 = arith.constant 0 : i32
    %c0_i32_0 = arith.constant 0 : i32
    %c0_i32_1 = arith.constant 0 : i32
    return %c0_i32, %c0_i32_0 : i32, i32
  }
  func.func @transform_11(%arg0: i32, %arg1: i32) -> (i32, i32, i32) {
    %c0_i32 = arith.constant 0 : i32
    %c0_i32_0 = arith.constant 0 : i32
    %c0_i32_1 = arith.constant 0 : i32
    return %arg0, %c0_i32, %c0_i32_0 : i32, i32, i32
  }
}

</mosaic_0001>

<llo_original>
// kernel: tpu_custom_call.1
$region0: #{tpu_custom_call.1}
  #allocation0 [shape = 'u32[]', space=smem, size = 0x4, offset = 0x4, fixed_abs, tag = 'smem constant byte address 0x4 - core index']
  #allocation1 [shape = 'u32[144,128]{1,0:T(1,128)}', space=vmem, size = 0x12000, scoped, tag = 'internal scratch']
  %s0 = inlined_call_operand.vmem [shape: bf16[2,8,32], index: 0, kind: input, shape index: {}]
  %s1 = inlined_call_operand.vmem [shape: bf16[2,8,32], index: 1, kind: input, shape index: {}]
  %s2 = inlined_call_operand.vmem [shape: bf16[2,8,32], index: 2, kind: input, shape index: {}]
  %s3 = inlined_call_operand.vmem [shape: bf16[4,32,8], index: 3, kind: input, shape index: {}]
  %s4 = inlined_call_operand.vmem [shape: f32[4,1,8], index: 4, kind: input, shape index: {}]
  %s5 = inlined_call_operand.vmem [shape: bf16[4,32,8], index: 5, kind: input, shape index: {}]
  %s6 = inlined_call_operand.vmem [shape: f32[4,1,8], index: 6, kind: input, shape index: {}]
  %s7 = inlined_call_operand.vmem [shape: bf16[4,32,8], index: 7, kind: input, shape index: {}]
  %s8 = inlined_call_operand.vmem [shape: f32[4,1,8], index: 8, kind: input, shape index: {}]
  %s9 = inlined_call_operand.vmem [shape: bf16[4,8,32], index: 9, kind: input, shape index: {}]
  %s10 = inlined_call_operand.vmem [shape: f32[1,32], index: 10, kind: input, shape index: {}]
  %s11 = inlined_call_operand.hbm [shape: f32[2,8,32], index: 11, kind: output, shape index: {}]
  %s12 = sld [smem:[#allocation0]]
  $region85: #{tpu_custom_call.1} parent=0
    _
  %s14 = ssub.s32 1, %s12
  %s15 = scalar_select 0, %s14, %s12
  $region1: #{tpu_custom_call.1} parent=0
    #allocation2 [shape = 'u8[8192]{0}', space=vmem, size = 0x2000, scoped, tag = 'output window, operand 0, single buffered']
    #allocation3 [shape = 's32[2]{0}', space=sflag, size = 0x8, scoped, tag = 'scoped memory for tpu_custom_call.1']
    %16 = vsyncpa [#allocation3], 0
    loop: start=0, step=1, limit=6
    $region2: #{tpu_custom_call.1} parent=1 // loop_pre_header
      _
    $region3: #{tpu_custom_call.1} parent=1 // loop_header
      %s18 = sphi 0, %s22
      %p19 = scmp.ge.s32.totalorder %s18, 6
      %s25 = sphi 0, %s37
      %s26 = sphi 0, %s33
      %s27 = sphi 0, %s25
      %s28 = sphi 0, %s26
      %s29 = sphi 0, %s27
      %s30 = sphi 0, %s28
      %s40 = sphi 0, %s42
      %s43 = sphi 0, %s40
      %s44 = sphi 0, %s43
      %s60 = sphi 0, %s44
      %s66 = sphi 0, %s68
      %s69 = sphi 0, %s66
      %s70 = sphi 0, %s69
      %s86 = sphi 0, %s70
      %s92 = sphi 0, %s94
      %s95 = sphi 0, %s92
      %s96 = sphi 0, %s95
      %s112 = sphi 0, %s96
      %s118 = sphi 0, %s120
      %s121 = sphi 0, %s118
      %s122 = sphi 0, %s121
      %s138 = sphi 0, %s122
      %s144 = sphi 0, %s146
      %s147 = sphi 0, %s144
      %s148 = sphi 0, %s147
      %s164 = sphi 0, %s148
      %s170 = sphi 0, %s172
      %s173 = sphi 0, %s170
      %s174 = sphi 0, %s173
      %s190 = sphi 0, %s174
      %s196 = sphi 0, %s198
      %s199 = sphi 0, %s196
      %s200 = sphi 0, %s199
      %s216 = sphi 0, %s200
      %s222 = sphi 0, %s224
      %s225 = sphi 0, %s222
      %s226 = sphi 0, %s225
      %s242 = sphi 0, %s226
      %s248 = sphi 0, %s250
      %s251 = sphi 0, %s248
      %s252 = sphi 0, %s251
      %s268 = sphi 0, %s252
      %s274 = sphi 0, %s276
      %s277 = sphi 0, %s274
      %s278 = sphi 0, %s277
      %s294 = sphi 0, %s278
      %s298 = sphi 0, %s298
      %s300 = sphi 0, %s298
      %s301 = sphi 0, %s300
      %s315 = sphi 0, %s301
      %s321 = sphi 0, %s323
      %s324 = sphi 0, %s321
      %s325 = sphi 0, %s324
      %s341 = sphi 0, %s325
    $region4: #{tpu_custom_call.1} parent=1 // loop_header_branch
      %21 = sbr.rel (%p19) target = $region8
    $region5: #{tpu_custom_call.1} parent=1 // loop_body
      %s23 = ssub.s32 %s18, 1
      %s24 = ssub.s32 %s18, 2
      %s31 = sadd.s32 1, %s26
      %p32 = scmp.ge.s32.totalorder %s31, 4
      %s33 = scalar_select %p32, 0, %s31
      %s34 = sadd.s32 1, %s25
      %s35 = scalar_select %p32, %s34, %s25
      %p36 = scmp.ge.s32.totalorder %s35, 1
      %s37 = scalar_select %p36, 0, %s35
      %s38 = ssub.s32 %s25, %s37
      %p39 = scmp.eq.s32.totalorder %s38, 0
      %s41 = sadd.s32 %s40, 1
      %s42 = scalar_select %p39, %s40, %s41
      %p45 = pneg %p39
      %p46 = scmp.eq.s32.totalorder %s18, 3
      %p47 = por %p45, %p46
      %p48 = scmp.ne.s32.totalorder %s40, %s43
      %p49 = scmp.eq.s32.totalorder %s18, 0
      %p50 = por %p48, %p49
      %p51 = scmp.ne.s32.totalorder %s40, %s43
      %p52 = scmp.eq.s32.totalorder %s23, 3
      %p53 = por %p51, %p52
      %p54 = scmp.ne.s32.totalorder %s43, %s44
      %p55 = scmp.eq.s32.totalorder %s23, 0
      %p56 = por %p54, %p55
      %p57 = scmp.ne.s32.totalorder %s43, %s44
      %p58 = scmp.eq.s32.totalorder %s24, 3
      %p59 = por %p57, %p58
      %p61 = scmp.ne.s32.totalorder %s44, %s60
      %p62 = scmp.eq.s32.totalorder %s24, 0
      %p63 = por %p61, %p62
      %s64 = ssub.s32 %s25, %s37
      %p65 = scmp.eq.s32.totalorder %s64, 0
      %s67 = sadd.s32 %s66, 1
      %s68 = scalar_select %p65, %s66, %s67
      %p71 = pneg %p65
      %p72 = scmp.eq.s32.totalorder %s18, 3
      %p73 = por %p71, %p72
      %p74 = scmp.ne.s32.totalorder %s66, %s69
      %p75 = scmp.eq.s32.totalorder %s18, 0
      %p76 = por %p74, %p75
      %p77 = scmp.ne.s32.totalorder %s66, %s69
      %p78 = scmp.eq.s32.totalorder %s23, 3
      %p79 = por %p77, %p78
      %p80 = scmp.ne.s32.totalorder %s69, %s70
      %p81 = scmp.eq.s32.totalorder %s23, 0
      %p82 = por %p80, %p81
      %p83 = scmp.ne.s32.totalorder %s69, %s70
      %p84 = scmp.eq.s32.totalorder %s24, 3
      %p85 = por %p83, %p84
      %p87 = scmp.ne.s32.totalorder %s70, %s86
      %p88 = scmp.eq.s32.totalorder %s24, 0
      %p89 = por %p87, %p88
      %s90 = ssub.s32 %s25, %s37
      %p91 = scmp.eq.s32.totalorder %s90, 0
      %s93 = sadd.s32 %s92, 1
      %s94 = scalar_select %p91, %s92, %s93
      %p97 = pneg %p91
      %p98 = scmp.eq.s32.totalorder %s18, 3
      %p99 = por %p97, %p98
      %p100 = scmp.ne.s32.totalorder %s92, %s95
      %p101 = scmp.eq.s32.totalorder %s18, 0
      %p102 = por %p100, %p101
      %p103 = scmp.ne.s32.totalorder %s92, %s95
      %p104 = scmp.eq.s32.totalorder %s23, 3
      %p105 = por %p103, %p104
      %p106 = scmp.ne.s32.totalorder %s95, %s96
      %p107 = scmp.eq.s32.totalorder %s23, 0
      %p108 = por %p106, %p107
      %p109 = scmp.ne.s32.totalorder %s95, %s96
      %p110 = scmp.eq.s32.totalorder %s24, 3
      %p111 = por %p109, %p110
      %p113 = scmp.ne.s32.totalorder %s96, %s112
      %p114 = scmp.eq.s32.totalorder %s24, 0
      %p115 = por %p113, %p114
      %s116 = ssub.s32 %s26, %s33
      %p117 = scmp.eq.s32.totalorder %s116, 0
      %s119 = sadd.s32 %s118, 1
      %s120 = scalar_select %p117, %s118, %s119
      %p123 = pneg %p117
      %p124 = scmp.eq.s32.totalorder %s18, 3
      %p125 = por %p123, %p124
      %p126 = scmp.ne.s32.totalorder %s118, %s121
      %p127 = scmp.eq.s32.totalorder %s18, 0
      %p128 = por %p126, %p127
      %p129 = scmp.ne.s32.totalorder %s118, %s121
      %p130 = scmp.eq.s32.totalorder %s23, 3
      %p131 = por %p129, %p130
      %p132 = scmp.ne.s32.totalorder %s121, %s122
      %p133 = scmp.eq.s32.totalorder %s23, 0
      %p134 = por %p132, %p133
      %p135 = scmp.ne.s32.totalorder %s121, %s122
      %p136 = scmp.eq.s32.totalorder %s24, 3
      %p137 = por %p135, %p136
      %p139 = scmp.ne.s32.totalorder %s122, %s138
      %p140 = scmp.eq.s32.totalorder %s24, 0
      %p141 = por %p139, %p140
      %s142 = ssub.s32 %s26, %s33
      %p143 = scmp.eq.s32.totalorder %s142, 0
      %s145 = sadd.s32 %s144, 1
      %s146 = scalar_select %p143, %s144, %s145
      %p149 = pneg %p143
      %p150 = scmp.eq.s32.totalorder %s18, 3
      %p151 = por %p149, %p150
      %p152 = scmp.ne.s32.totalorder %s144, %s147
      %p153 = scmp.eq.s32.totalorder %s18, 0
      %p154 = por %p152, %p153
      %p155 = scmp.ne.s32.totalorder %s144, %s147
      %p156 = scmp.eq.s32.totalorder %s23, 3
      %p157 = por %p155, %p156
      %p158 = scmp.ne.s32.totalorder %s147, %s148
      %p159 = scmp.eq.s32.totalorder %s23, 0
      %p160 = por %p158, %p159
      %p161 = scmp.ne.s32.totalorder %s147, %s148
      %p162 = scmp.eq.s32.totalorder %s24, 3
      %p163 = por %p161, %p162
      %p165 = scmp.ne.s32.totalorder %s148, %s164
      %p166 = scmp.eq.s32.totalorder %s24, 0
      %p167 = por %p165, %p166
      %s168 = ssub.s32 %s26, %s33
      %p169 = scmp.eq.s32.totalorder %s168, 0
      %s171 = sadd.s32 %s170, 1
      %s172 = scalar_select %p169, %s170, %s171
      %p175 = pneg %p169
      %p176 = scmp.eq.s32.totalorder %s18, 3
      %p177 = por %p175, %p176
      %p178 = scmp.ne.s32.totalorder %s170, %s173
      %p179 = scmp.eq.s32.totalorder %s18, 0
      %p180 = por %p178, %p179
      %p181 = scmp.ne.s32.totalorder %s170, %s173
      %p182 = scmp.eq.s32.totalorder %s23, 3
      %p183 = por %p181, %p182
      %p184 = scmp.ne.s32.totalorder %s173, %s174
      %p185 = scmp.eq.s32.totalorder %s23, 0
      %p186 = por %p184, %p185
      %p187 = scmp.ne.s32.totalorder %s173, %s174
      %p188 = scmp.eq.s32.totalorder %s24, 3
      %p189 = por %p187, %p188
      %p191 = scmp.ne.s32.totalorder %s174, %s190
      %p192 = scmp.eq.s32.totalorder %s24, 0
      %p193 = por %p191, %p192
      %s194 = ssub.s32 %s26, %s33
      %p195 = scmp.eq.s32.totalorder %s194, 0
      %s197 = sadd.s32 %s196, 1
      %s198 = scalar_select %p195, %s196, %s197
      %p201 = pneg %p195
      %p202 = scmp.eq.s32.totalorder %s18, 3
      %p203 = por %p201, %p202
      %p204 = scmp.ne.s32.totalorder %s196, %s199
      %p205 = scmp.eq.s32.totalorder %s18, 0
      %p206 = por %p204, %p205
      %p207 = scmp.ne.s32.totalorder %s196, %s199
      %p208 = scmp.eq.s32.totalorder %s23, 3
      %p209 = por %p207, %p208
      %p210 = scmp.ne.s32.totalorder %s199, %s200
      %p211 = scmp.eq.s32.totalorder %s23, 0
      %p212 = por %p210, %p211
      %p213 = scmp.ne.s32.totalorder %s199, %s200
      %p214 = scmp.eq.s32.totalorder %s24, 3
      %p215 = por %p213, %p214
      %p217 = scmp.ne.s32.totalorder %s200, %s216
      %p218 = scmp.eq.s32.totalorder %s24, 0
      %p219 = por %p217, %p218
      %s220 = ssub.s32 %s26, %s33
      %p221 = scmp.eq.s32.totalorder %s220, 0
      %s223 = sadd.s32 %s222, 1
      %s224 = scalar_select %p221, %s222, %s223
      %p227 = pneg %p221
      %p228 = scmp.eq.s32.totalorder %s18, 3
      %p229 = por %p227, %p228
      %p230 = scmp.ne.s32.totalorder %s222, %s225
      %p231 = scmp.eq.s32.totalorder %s18, 0
      %p232 = por %p230, %p231
      %p233 = scmp.ne.s32.totalorder %s222, %s225
      %p234 = scmp.eq.s32.totalorder %s23, 3
      %p235 = por %p233, %p234
      %p236 = scmp.ne.s32.totalorder %s225, %s226
      %p237 = scmp.eq.s32.totalorder %s23, 0
      %p238 = por %p236, %p237
      %p239 = scmp.ne.s32.totalorder %s225, %s226
      %p240 = scmp.eq.s32.totalorder %s24, 3
      %p241 = por %p239, %p240
      %p243 = scmp.ne.s32.totalorder %s226, %s242
      %p244 = scmp.eq.s32.totalorder %s24, 0
      %p245 = por %p243, %p244
      %s246 = ssub.s32 %s26, %s33
      %p247 = scmp.eq.s32.totalorder %s246, 0
      %s249 = sadd.s32 %s248, 1
      %s250 = scalar_select %p247, %s248, %s249
      %p253 = pneg %p247
      %p254 = scmp.eq.s32.totalorder %s18, 3
      %p255 = por %p253, %p254
      %p256 = scmp.ne.s32.totalorder %s248, %s251
      %p257 = scmp.eq.s32.totalorder %s18, 0
      %p258 = por %p256, %p257
      %p259 = scmp.ne.s32.totalorder %s248, %s251
      %p260 = scmp.eq.s32.totalorder %s23, 3
      %p261 = por %p259, %p260
      %p262 = scmp.ne.s32.totalorder %s251, %s252
      %p263 = scmp.eq.s32.totalorder %s23, 0
      %p264 = por %p262, %p263
      %p265 = scmp.ne.s32.totalorder %s251, %s252
      %p266 = scmp.eq.s32.totalorder %s24, 3
      %p267 = por %p265, %p266
      %p269 = scmp.ne.s32.totalorder %s252, %s268
      %p270 = scmp.eq.s32.totalorder %s24, 0
      %p271 = por %p269, %p270
      %s272 = ssub.s32 %s26, %s33
      %p273 = scmp.eq.s32.totalorder %s272, 0
      %s275 = sadd.s32 %s274, 1
      %s276 = scalar_select %p273, %s274, %s275
      %p279 = pneg %p273
      %p280 = scmp.eq.s32.totalorder %s18, 3
      %p281 = por %p279, %p280
      %p282 = scmp.ne.s32.totalorder %s274, %s277
      %p283 = scmp.eq.s32.totalorder %s18, 0
      %p284 = por %p282, %p283
      %p285 = scmp.ne.s32.totalorder %s274, %s277
      %p286 = scmp.eq.s32.totalorder %s23, 3
      %p287 = por %p285, %p286
      %p288 = scmp.ne.s32.totalorder %s277, %s278
      %p289 = scmp.eq.s32.totalorder %s23, 0
      %p290 = por %p288, %p289
      %p291 = scmp.ne.s32.totalorder %s277, %s278
      %p292 = scmp.eq.s32.totalorder %s24, 3
      %p293 = por %p291, %p292
      %p295 = scmp.ne.s32.totalorder %s278, %s294
      %p296 = scmp.eq.s32.totalorder %s24, 0
      %p297 = por %p295, %p296
      %s299 = sadd.s32 %s298, 1
      %p302 = scmp.eq.s32.totalorder %s18, 3
      %p303 = scmp.ne.s32.totalorder %s298, %s300
      %p304 = scmp.eq.s32.totalorder %s18, 0
      %p305 = por %p303, %p304
      %p306 = scmp.ne.s32.totalorder %s298, %s300
      %p307 = scmp.eq.s32.totalorder %s23, 3
      %p308 = por %p306, %p307
      %p309 = scmp.ne.s32.totalorder %s300, %s301
      %p310 = scmp.eq.s32.totalorder %s23, 0
      %p311 = por %p309, %p310
      %p312 = scmp.ne.s32.totalorder %s300, %s301
      %p313 = scmp.eq.s32.totalorder %s24, 3
      %p314 = por %p312, %p313
      %p316 = scmp.ne.s32.totalorder %s301, %s315
      %p317 = scmp.eq.s32.totalorder %s24, 0
      %p318 = por %p316, %p317
      %s319 = ssub.s32 %s25, %s37
      %p320 = scmp.eq.s32.totalorder %s319, 0
      %s322 = sadd.s32 %s321, 1
      %s323 = scalar_select %p320, %s321, %s322
      %p326 = pneg %p320
      %p327 = scmp.eq.s32.totalorder %s18, 3
      %p328 = por %p326, %p327
      %p329 = scmp.ne.s32.totalorder %s321, %s324
      %p330 = scmp.eq.s32.totalorder %s18, 0
      %p331 = por %p329, %p330
      %p332 = scmp.ne.s32.totalorder %s321, %s324
      %p333 = scmp.eq.s32.totalorder %s23, 3
      %p334 = por %p332, %p333
      %p335 = scmp.ne.s32.totalorder %s324, %s325
      %p336 = scmp.eq.s32.totalorder %s23, 0
      %p337 = por %p335, %p336
      %p338 = scmp.ne.s32.totalorder %s324, %s325
      %p339 = scmp.eq.s32.totalorder %s24, 3
      %p340 = por %p338, %p339
      %p342 = scmp.ne.s32.totalorder %s325, %s341
      %p343 = scmp.eq.s32.totalorder %s24, 0
      %p344 = por %p342, %p343
      %p345 = scmp.le.s32.totalorder 1, %s18
      %p346 = scmp.lt.s32.totalorder %s18, 5
      %p347 = pnand %p345, %p346
      %p348 = pneg %p347
      // Predicated region
      $region9: #{tpu_custom_call.1} parent=5 // pred_check
        _
      $region10: #{tpu_custom_call.1} parent=5 // pred_check_branch
        %350 = sbr.rel (%p347) target = $region12
      $region11: #{tpu_custom_call.1} parent=5 // pred_region
        %s351 = ssub.s32 %s18, 1
        // Predicated region
        $region13: #{tpu_custom_call.1} parent=11 // pred_check
          %p352 = pneg %p56
        $region14: #{tpu_custom_call.1} parent=11 // pred_check_branch
          %354 = sbr.rel (%p352) target = $region16
        $region15: #{tpu_custom_call.1} parent=11 // pred_region
          %s355 = smul.u32 2, %s27
          %p356 = scmp.lt.s32.totalorder %s355, 1
          %s357 = scalar_select %p356, %s355, 1
          %s358 = smul.addr %s357, 4
          %s359 = scalar_lea.vmem %s0, %s358
          %s360 = smul.u32 2, %s27
        $region16: #{tpu_custom_call.1} parent=11 // pred_fallthru
          _
        // Predicated region
        $region17: #{tpu_custom_call.1} parent=11 // pred_check
          %p361 = pneg %p82
        $region18: #{tpu_custom_call.1} parent=11 // pred_check_branch
          %363 = sbr.rel (%p361) target = $region20
        $region19: #{tpu_custom_call.1} parent=11 // pred_region
          %s364 = smul.u32 2, %s27
          %p365 = scmp.lt.s32.totalorder %s364, 1
          %s366 = scalar_select %p365, %s364, 1
          %s367 = smul.addr %s366, 4
          %s368 = scalar_lea.vmem %s1, %s367
          %s369 = smul.u32 2, %s27
        $region20: #{tpu_custom_call.1} parent=11 // pred_fallthru
          _
        // Predicated region
        $region21: #{tpu_custom_call.1} parent=11 // pred_check
          %p370 = pneg %p108
        $region22: #{tpu_custom_call.1} parent=11 // pred_check_branch
          %372 = sbr.rel (%p370) target = $region24
        $region23: #{tpu_custom_call.1} parent=11 // pred_region
          %s373 = smul.u32 2, %s27
          %p374 = scmp.lt.s32.totalorder %s373, 1
          %s375 = scalar_select %p374, %s373, 1
          %s376 = smul.addr %s375, 4
          %s377 = scalar_lea.vmem %s2, %s376
          %s378 = smul.u32 2, %s27
        $region24: #{tpu_custom_call.1} parent=11 // pred_fallthru
          _
        // Predicated region
        $region25: #{tpu_custom_call.1} parent=11 // pred_check
          %p379 = pneg %p311
        $region26: #{tpu_custom_call.1} parent=11 // pred_check_branch
          %381 = sbr.rel (%p379) target = $region28
        $region27: #{tpu_custom_call.1} parent=11 // pred_region
          _
        $region28: #{tpu_custom_call.1} parent=11 // pred_fallthru
          _
      $region12: #{tpu_custom_call.1} parent=5 // pred_fallthru
        _
      %p382 = scmp.lt.s32.totalorder %s18, 4
      // Predicated region
      $region29: #{tpu_custom_call.1} parent=5 // pred_check
        %p383 = pneg %p382
      $region30: #{tpu_custom_call.1} parent=5 // pred_check_branch
        %385 = sbr.rel (%p383) target = $region32
      $region31: #{tpu_custom_call.1} parent=5 // pred_region
        // Predicated region
        $region33: #{tpu_custom_call.1} parent=31 // pred_check
          %p386 = pneg %p128
        $region34: #{tpu_custom_call.1} parent=31 // pred_check_branch
          %388 = sbr.rel (%p386) target = $region36
        $region35: #{tpu_custom_call.1} parent=31 // pred_region
          %p389 = scmp.lt.s32.totalorder %s26, 3
          %s390 = scalar_select %p389, %s26, 3
          %s391 = smul.addr %s390, 4
          %s392 = smul.addr %s391, 4
          %s393 = scalar_lea.vmem %s3, %s392
        $region36: #{tpu_custom_call.1} parent=31 // pred_fallthru
          _
        // Predicated region
        $region37: #{tpu_custom_call.1} parent=31 // pred_check
          %p394 = pneg %p154
        $region38: #{tpu_custom_call.1} parent=31 // pred_check_branch
          %396 = sbr.rel (%p394) target = $region40
        $region39: #{tpu_custom_call.1} parent=31 // pred_region
          %p397 = scmp.lt.s32.totalorder %s26, 3
          %s398 = scalar_select %p397, %s26, 3
          %s399 = scalar_lea.vmem %s4, %s398
        $region40: #{tpu_custom_call.1} parent=31 // pred_fallthru
          _
        // Predicated region
        $region41: #{tpu_custom_call.1} parent=31 // pred_check
          %p400 = pneg %p180
        $region42: #{tpu_custom_call.1} parent=31 // pred_check_branch
          %402 = sbr.rel (%p400) target = $region44
        $region43: #{tpu_custom_call.1} parent=31 // pred_region
          %p403 = scmp.lt.s32.totalorder %s26, 3
          %s404 = scalar_select %p403, %s26, 3
          %s405 = smul.addr %s404, 4
          %s406 = smul.addr %s405, 4
          %s407 = scalar_lea.vmem %s5, %s406
        $region44: #{tpu_custom_call.1} parent=31 // pred_fallthru
          _
        // Predicated region
        $region45: #{tpu_custom_call.1} parent=31 // pred_check
          %p408 = pneg %p206
        $region46: #{tpu_custom_call.1} parent=31 // pred_check_branch
          %410 = sbr.rel (%p408) target = $region48
        $region47: #{tpu_custom_call.1} parent=31 // pred_region
          %p411 = scmp.lt.s32.totalorder %s26, 3
          %s412 = scalar_select %p411, %s26, 3
          %s413 = scalar_lea.vmem %s6, %s412
        $region48: #{tpu_custom_call.1} parent=31 // pred_fallthru
          _
        // Predicated region
        $region49: #{tpu_custom_call.1} parent=31 // pred_check
          %p414 = pneg %p232
        $region50: #{tpu_custom_call.1} parent=31 // pred_check_branch
          %416 = sbr.rel (%p414) target = $region52
        $region51: #{tpu_custom_call.1} parent=31 // pred_region
          %p417 = scmp.lt.s32.totalorder %s26, 3
          %s418 = scalar_select %p417, %s26, 3
          %s419 = smul.addr %s418, 4
          %s420 = smul.addr %s419, 4
          %s421 = scalar_lea.vmem %s7, %s420
        $region52: #{tpu_custom_call.1} parent=31 // pred_fallthru
          _
        // Predicated region
        $region53: #{tpu_custom_call.1} parent=31 // pred_check
          %p422 = pneg %p258
        $region54: #{tpu_custom_call.1} parent=31 // pred_check_branch
          %424 = sbr.rel (%p422) target = $region56
        $region55: #{tpu_custom_call.1} parent=31 // pred_region
          %p425 = scmp.lt.s32.totalorder %s26, 3
          %s426 = scalar_select %p425, %s26, 3
          %s427 = scalar_lea.vmem %s8, %s426
        $region56: #{tpu_custom_call.1} parent=31 // pred_fallthru
          _
        // Predicated region
        $region57: #{tpu_custom_call.1} parent=31 // pred_check
          %p428 = pneg %p284
        $region58: #{tpu_custom_call.1} parent=31 // pred_check_branch
          %430 = sbr.rel (%p428) target = $region60
        $region59: #{tpu_custom_call.1} parent=31 // pred_region
          %p431 = scmp.lt.s32.totalorder %s26, 3
          %s432 = scalar_select %p431, %s26, 3
          %s433 = smul.addr %s432, 4
          %s434 = scalar_lea.vmem %s9, %s433
        $region60: #{tpu_custom_call.1} parent=31 // pred_fallthru
          _
      $region32: #{tpu_custom_call.1} parent=5 // pred_fallthru
        _
      %p435 = scmp.le.s32.totalorder 1, %s18
      %p436 = scmp.lt.s32.totalorder %s18, 5
      %p437 = pnand %p435, %p436
      %p438 = pneg %p437
      // Predicated region
      $region61: #{tpu_custom_call.1} parent=5 // pred_check
        _
      $region62: #{tpu_custom_call.1} parent=5 // pred_check_branch
        %440 = sbr.rel (%p437) target = $region64
      $region63: #{tpu_custom_call.1} parent=5 // pred_region
        %s441 = ssub.s32 %s18, 1
        %s442 = smul.u32 2, %s27
        %p443 = scmp.lt.s32.totalorder %s442, 1
        %s444 = scalar_select %p443, %s442, 1
        %s445 = smul.addr %s444, 4
        %s446 = scalar_lea.vmem %s0, %s445
        %p447 = pneg %p56
        %p448 = pneg %p53
        %s449 = smul.u32 2, %s27
        %p450 = scmp.lt.s32.totalorder %s449, 1
        %s451 = scalar_select %p450, %s449, 1
        %s452 = smul.addr %s451, 4
        %s453 = scalar_lea.vmem %s1, %s452
        %p454 = pneg %p82
        %p455 = pneg %p79
        %s456 = smul.u32 2, %s27
        %p457 = scmp.lt.s32.totalorder %s456, 1
        %s458 = scalar_select %p457, %s456, 1
        %s459 = smul.addr %s458, 4
        %s460 = scalar_lea.vmem %s2, %s459
        %p461 = pneg %p108
        %p462 = pneg %p105
        %p463 = scmp.lt.s32.totalorder %s28, 3
        %s464 = scalar_select %p463, %s28, 3
        %s465 = smul.addr %s464, 4
        %s466 = smul.addr %s465, 4
        %s467 = scalar_lea.vmem %s3, %s466
        %p468 = pneg %p134
        %p469 = pneg %p131
        %p470 = scmp.lt.s32.totalorder %s28, 3
        %s471 = scalar_select %p470, %s28, 3
        %s472 = scalar_lea.vmem %s4, %s471
        %p473 = pneg %p160
        %p474 = pneg %p157
        %p475 = scmp.lt.s32.totalorder %s28, 3
        %s476 = scalar_select %p475, %s28, 3
        %s477 = smul.addr %s476, 4
        %s478 = smul.addr %s477, 4
        %s479 = scalar_lea.vmem %s5, %s478
        %p480 = pneg %p186
        %p481 = pneg %p183
        %p482 = scmp.lt.s32.totalorder %s28, 3
        %s483 = scalar_select %p482, %s28, 3
        %s484 = scalar_lea.vmem %s6, %s483
        %p485 = pneg %p212
        %p486 = pneg %p209
        %p487 = scmp.lt.s32.totalorder %s28, 3
        %s488 = scalar_select %p487, %s28, 3
        %s489 = smul.addr %s488, 4
        %s490 = smul.addr %s489, 4
        %s491 = scalar_lea.vmem %s7, %s490
        %p492 = pneg %p238
        %p493 = pneg %p235
        %p494 = scmp.lt.s32.totalorder %s28, 3
        %s495 = scalar_select %p494, %s28, 3
        %s496 = scalar_lea.vmem %s8, %s495
        %p497 = pneg %p264
        %p498 = pneg %p261
        %p499 = scmp.lt.s32.totalorder %s28, 3
        %s500 = scalar_select %p499, %s28, 3
        %s501 = smul.addr %s500, 4
        %s502 = scalar_lea.vmem %s9, %s501
        %p503 = pneg %p290
        %p504 = pneg %p287
        %p505 = pneg %p311
        %p506 = pneg %p308
        %p507 = pneg %p337
        %p508 = pneg %p334
        %s509 = smul.u32 2, %s27
        %p510 = scmp.lt.s32.totalorder %s509, 1
        %s511 = scalar_select %p510, %s509, 1
        %s512 = smul.addr %s511, 4
        %s513 = scalar_lea.vmem %s0, %s512
        %s514 = smul.u32 2, %s27
        %s515 = smul.u32 2, %s27
        %p516 = scmp.lt.s32.totalorder %s515, 1
        %s517 = scalar_select %p516, %s515, 1
        %s518 = smul.addr %s517, 4
        %s519 = scalar_lea.vmem %s1, %s518
        %s520 = smul.u32 2, %s27
        %s521 = smul.u32 2, %s27
        %p522 = scmp.lt.s32.totalorder %s521, 1
        %s523 = scalar_select %p522, %s521, 1
        %s524 = smul.addr %s523, 4
        %s525 = scalar_lea.vmem %s2, %s524
        %s526 = smul.u32 2, %s27
        %p527 = scmp.lt.s32.totalorder %s28, 3
        %s528 = scalar_select %p527, %s28, 3
        %s529 = smul.addr %s528, 4
        %s530 = smul.addr %s529, 4
        %s531 = scalar_lea.vmem %s3, %s530
        %p532 = scmp.lt.s32.totalorder %s28, 3
        %s533 = scalar_select %p532, %s28, 3
        %s534 = scalar_lea.vmem %s4, %s533
        %p535 = scmp.lt.s32.totalorder %s28, 3
        %s536 = scalar_select %p535, %s28, 3
        %s537 = smul.addr %s536, 4
        %s538 = smul.addr %s537, 4
        %s539 = scalar_lea.vmem %s5, %s538
        %p540 = scmp.lt.s32.totalorder %s28, 3
        %s541 = scalar_select %p540, %s28, 3
        %s542 = scalar_lea.vmem %s6, %s541
        %p543 = scmp.lt.s32.totalorder %s28, 3
        %s544 = scalar_select %p543, %s28, 3
        %s545 = smul.addr %s544, 4
        %s546 = smul.addr %s545, 4
        %s547 = scalar_lea.vmem %s7, %s546
        %p548 = scmp.lt.s32.totalorder %s28, 3
        %s549 = scalar_select %p548, %s28, 3
        %s550 = scalar_lea.vmem %s8, %s549
        %p551 = scmp.lt.s32.totalorder %s28, 3
        %s552 = scalar_select %p551, %s28, 3
        %s553 = smul.addr %s552, 4
        %s554 = scalar_lea.vmem %s9, %s553
        %s555 = smul.u32 2, %s27
        %v557 = vld [vmem:[%s513] sm:$0xf]
        %v558 = vld [vmem:[%s513 + $0x4] sm:$0xf]
        %v559 = vld [vmem:[%s519] sm:$0xf]
        %v560 = vld [vmem:[%s519 + $0x4] sm:$0xf]
        %v561 = vld [vmem:[%s525] sm:$0xf]
        %v562 = vld [vmem:[%s525 + $0x4] sm:$0xf]
        %v563 = vld [vmem:[%s531] sm:$0xf]
        %v564 = vld [vmem:[%s531 + $0x4] sm:$0xf]
        %v565 = vld [vmem:[%s531 + $0x8] sm:$0xf]
        %v566 = vld [vmem:[%s531 + $0xc] sm:$0xf]
        %v567 = vld [vmem:[%s534] sm:$0x1]
        %v569 = vlaneseq
        %v570 = vshrl.u32 %v569, 7
        %v571 = vsub.s32 0, %v570
        %v572 = vrot.slane %v567, %v571
        %v576 = vunpack.c.l.b16 %v557
        %v577 = vunpack.c.l.b16 %v558
        %v578 = vpack.c.b16 %v577, %v576
        %v583 = vunpack.c.l.b16 %v563
        %v584 = vunpack.c.l.b16 %v564
        %v585 = vunpack.c.l.b16 %v565
        %v586 = vunpack.c.l.b16 %v566
        %v587 = vpack.c.b16 %v584, %v583
        %v588 = vpack.c.b16 %v586, %v585
        %vm591 = vcmask 261120
        %v593 = vsel %vm591, %v578, 0
        %595 = vmatprep.subr.bf16.mxu0 0
        %596 = vmatpush1.bf16.msra.mxu0 %v587
        %597 = vmatprep.subr.bf16.mxu0 0
        %598 = vmatpush1.bf16.msra.mxu0 %v588
        %599 = vmatprep.subr.bf16.mxu0 0
        %600 = vmatpush1.bf16.msra.mxu0 0
        %601 = vmatprep.subr.bf16.mxu0 0
        %602 = vmatpush1.bf16.msra.mxu0 0
        %603 = vmatprep.subr.bf16.mxu0 0
        %604 = vmatpush1.bf16.msra.mxu0 0
        %605 = vmatprep.subr.bf16.mxu0 0
        %606 = vmatpush1.bf16.msra.mxu0 0
        %607 = vmatprep.subr.bf16.mxu0 0
        %608 = vmatpush1.bf16.msra.mxu0 0
        %609 = vmatprep.subr.bf16.mxu0 0
        %610 = vmatpush1.bf16.msra.mxu0 0
        %611 = vmatprep.subr.bf16.mxu0 0
        %612 = vmatpush1.bf16.msra.mxu0 0
        %613 = vmatprep.subr.bf16.mxu0 0
        %614 = vmatpush1.bf16.msra.mxu0 0
        %615 = vmatprep.subr.bf16.mxu0 0
        %616 = vmatpush1.bf16.msra.mxu0 0
        %617 = vmatprep.subr.bf16.mxu0 0
        %618 = vmatpush1.bf16.msra.mxu0 0
        %619 = vmatprep.subr.bf16.mxu0 0
        %620 = vmatpush1.bf16.msra.mxu0 0
        %621 = vmatprep.subr.bf16.mxu0 0
        %622 = vmatpush1.bf16.msra.mxu0 0
        %623 = vmatprep.subr.bf16.mxu0 0
        %624 = vmatpush1.bf16.msra.mxu0 0
        %625 = vmatprep.subr.bf16.mxu0 0
        %626 = vmatpush1.bf16.msra.mxu0 0
        %627 = vmatprep.mubr.bf16.mxu0 0
        %628 = vmatmul.mubr.bf16.gmra.mrb[0].mxu0 %v593
        %v629 = vpop.f32.mrb[0].mxu0
        %v630 = vadd.f32 %v572, %v629
        %v631 = vpop.f32.mrb[0].mxu0
        %v632 = vpop.f32.mrb[0].mxu0
        %v633 = vadd.f32 %v572, %v632
        %v634 = vpop.f32.mrb[0].mxu0
        %635 = vdwg.mxu0
        %v636 = vld [vmem:[%s539] sm:$0xf]
        %v637 = vld [vmem:[%s539 + $0x4] sm:$0xf]
        %v638 = vld [vmem:[%s539 + $0x8] sm:$0xf]
        %v639 = vld [vmem:[%s539 + $0xc] sm:$0xf]
        %v640 = vld [vmem:[%s542] sm:$0x1]
        %v642 = vlaneseq
        %v643 = vshrl.u32 %v642, 7
        %v644 = vsub.s32 0, %v643
        %v645 = vrot.slane %v640, %v644
        %v649 = vunpack.c.l.b16 %v559
        %v650 = vunpack.c.l.b16 %v560
        %v651 = vpack.c.b16 %v650, %v649
        %v656 = vunpack.c.l.b16 %v636
        %v657 = vunpack.c.l.b16 %v637
        %v658 = vunpack.c.l.b16 %v638
        %v659 = vunpack.c.l.b16 %v639
        %v660 = vpack.c.b16 %v657, %v656
        %v661 = vpack.c.b16 %v659, %v658
        %v665 = vsel %vm591, %v651, 0
        %667 = vmatprep.subr.bf16.mxu0 0
        %668 = vmatpush1.bf16.msra.mxu0 %v660
        %669 = vmatprep.subr.bf16.mxu0 0
        %670 = vmatpush1.bf16.msra.mxu0 %v661
        %671 = vmatprep.subr.bf16.mxu0 0
        %672 = vmatpush1.bf16.msra.mxu0 0
        %673 = vmatprep.subr.bf16.mxu0 0
        %674 = vmatpush1.bf16.msra.mxu0 0
        %675 = vmatprep.subr.bf16.mxu0 0
        %676 = vmatpush1.bf16.msra.mxu0 0
        %677 = vmatprep.subr.bf16.mxu0 0
        %678 = vmatpush1.bf16.msra.mxu0 0
        %679 = vmatprep.subr.bf16.mxu0 0
        %680 = vmatpush1.bf16.msra.mxu0 0
        %681 = vmatprep.subr.bf16.mxu0 0
        %682 = vmatpush1.bf16.msra.mxu0 0
        %683 = vmatprep.subr.bf16.mxu0 0
        %684 = vmatpush1.bf16.msra.mxu0 0
        %685 = vmatprep.subr.bf16.mxu0 0
        %686 = vmatpush1.bf16.msra.mxu0 0
        %687 = vmatprep.subr.bf16.mxu0 0
        %688 = vmatpush1.bf16.msra.mxu0 0
        %689 = vmatprep.subr.bf16.mxu0 0
        %690 = vmatpush1.bf16.msra.mxu0 0
        %691 = vmatprep.subr.bf16.mxu0 0
        %692 = vmatpush1.bf16.msra.mxu0 0
        %693 = vmatprep.subr.bf16.mxu0 0
        %694 = vmatpush1.bf16.msra.mxu0 0
        %695 = vmatprep.subr.bf16.mxu0 0
        %696 = vmatpush1.bf16.msra.mxu0 0
        %697 = vmatprep.subr.bf16.mxu0 0
        %698 = vmatpush1.bf16.msra.mxu0 0
        %699 = vmatprep.mubr.bf16.mxu0 0
        %700 = vmatmul.mubr.bf16.gmra.mrb[0].mxu0 %v665
        %v701 = vpop.f32.mrb[0].mxu0
        %v702 = vadd.f32 %v645, %v701
        %v703 = vpop.f32.mrb[0].mxu0
        %v704 = vpop.f32.mrb[0].mxu0
        %v705 = vadd.f32 %v645, %v704
        %v706 = vpop.f32.mrb[0].mxu0
        %707 = vdwg.mxu0
        %v708 = vld [vmem:[%s547] sm:$0xf]
        %v709 = vld [vmem:[%s547 + $0x4] sm:$0xf]
        %v710 = vld [vmem:[%s547 + $0x8] sm:$0xf]
        %v711 = vld [vmem:[%s547 + $0xc] sm:$0xf]
        %v712 = vld [vmem:[%s550] sm:$0x1]
        %v714 = vlaneseq
        %v715 = vshrl.u32 %v714, 7
        %v716 = vsub.s32 0, %v715
        %v717 = vrot.slane %v712, %v716
        %v721 = vunpack.c.l.b16 %v561
        %v722 = vunpack.c.l.b16 %v562
        %v723 = vpack.c.b16 %v722, %v721
        %v728 = vunpack.c.l.b16 %v708
        %v729 = vunpack.c.l.b16 %v709
        %v730 = vunpack.c.l.b16 %v710
        %v731 = vunpack.c.l.b16 %v711
        %v732 = vpack.c.b16 %v729, %v728
        %v733 = vpack.c.b16 %v731, %v730
        %v737 = vsel %vm591, %v723, 0
        %739 = vmatprep.subr.bf16.mxu0 0
        %740 = vmatpush1.bf16.msra.mxu0 %v732
        %741 = vmatprep.subr.bf16.mxu0 0
        %742 = vmatpush1.bf16.msra.mxu0 %v733
        %743 = vmatprep.subr.bf16.mxu0 0
        %744 = vmatpush1.bf16.msra.mxu0 0
        %745 = vmatprep.subr.bf16.mxu0 0
        %746 = vmatpush1.bf16.msra.mxu0 0
        %747 = vmatprep.subr.bf16.mxu0 0
        %748 = vmatpush1.bf16.msra.mxu0 0
        %749 = vmatprep.subr.bf16.mxu0 0
        %750 = vmatpush1.bf16.msra.mxu0 0
        %751 = vmatprep.subr.bf16.mxu0 0
        %752 = vmatpush1.bf16.msra.mxu0 0
        %753 = vmatprep.subr.bf16.mxu0 0
        %754 = vmatpush1.bf16.msra.mxu0 0
        %755 = vmatprep.subr.bf16.mxu0 0
        %756 = vmatpush1.bf16.msra.mxu0 0
        %757 = vmatprep.subr.bf16.mxu0 0
        %758 = vmatpush1.bf16.msra.mxu0 0
        %759 = vmatprep.subr.bf16.mxu0 0
        %760 = vmatpush1.bf16.msra.mxu0 0
        %761 = vmatprep.subr.bf16.mxu0 0
        %762 = vmatpush1.bf16.msra.mxu0 0
        %763 = vmatprep.subr.bf16.mxu0 0
        %764 = vmatpush1.bf16.msra.mxu0 0
        %765 = vmatprep.subr.bf16.mxu0 0
        %766 = vmatpush1.bf16.msra.mxu0 0
        %767 = vmatprep.subr.bf16.mxu0 0
        %768 = vmatpush1.bf16.msra.mxu0 0
        %769 = vmatprep.subr.bf16.mxu0 0
        %770 = vmatpush1.bf16.msra.mxu0 0
        %771 = vmatprep.mubr.bf16.mxu0 0
        %772 = vmatmul.mubr.bf16.gmra.mrb[0].mxu0 %v737
        %v773 = vpop.f32.mrb[0].mxu0
        %v774 = vadd.f32 %v717, %v773
        %v775 = vpop.f32.mrb[0].mxu0
        %v776 = vpop.f32.mrb[0].mxu0
        %v777 = vadd.f32 %v717, %v776
        %v778 = vpop.f32.mrb[0].mxu0
        %779 = vdwg.mxu0
        %v780 = vmul.f32 %v630, 0.35355338
        %v781 = vmul.f32 %v633, 0.35355338
        %v782 = vpack.c.bf16 %v780, %v780
        %v783 = vpack.c.bf16 %v781, %v781
        %v784 = vpack.c.bf16 %v702, %v702
        %v785 = vpack.c.bf16 %v705, %v705
        %vm786 = vcmask 64512
        %v788 = vsel %vm786, %v782, 0
        %v791 = vsel %vm786, %v784, 0
        %793 = vmatprep.subr.bf16.mxu0 0
        %794 = vmatpush1.bf16.xpose.msra.mxu0 %v791
        %795 = vmatprep.subr.bf16.mxu0 0
        %796 = vmatpush1.bf16.xpose.msra.mxu0 0
        %797 = vmatprep.subr.bf16.mxu0 0
        %798 = vmatpush1.bf16.xpose.msra.mxu0 0
        %799 = vmatprep.subr.bf16.mxu0 0
        %800 = vmatpush1.bf16.xpose.msra.mxu0 0
        %801 = vmatprep.subr.bf16.mxu0 0
        %802 = vmatpush1.bf16.xpose.msra.mxu0 0
        %803 = vmatprep.subr.bf16.mxu0 0
        %804 = vmatpush1.bf16.xpose.msra.mxu0 0
        %805 = vmatprep.subr.bf16.mxu0 0
        %806 = vmatpush1.bf16.xpose.msra.mxu0 0
        %807 = vmatprep.subr.bf16.mxu0 0
        %808 = vmatpush1.bf16.xpose.msra.mxu0 0
        %809 = vmatprep.subr.bf16.mxu0 0
        %810 = vmatpush1.bf16.xpose.msra.mxu0 0
        %811 = vmatprep.subr.bf16.mxu0 0
        %812 = vmatpush1.bf16.xpose.msra.mxu0 0
        %813 = vmatprep.subr.bf16.mxu0 0
        %814 = vmatpush1.bf16.xpose.msra.mxu0 0
        %815 = vmatprep.subr.bf16.mxu0 0
        %816 = vmatpush1.bf16.xpose.msra.mxu0 0
        %817 = vmatprep.subr.bf16.mxu0 0
        %818 = vmatpush1.bf16.xpose.msra.mxu0 0
        %819 = vmatprep.subr.bf16.mxu0 0
        %820 = vmatpush1.bf16.xpose.msra.mxu0 0
        %821 = vmatprep.subr.bf16.mxu0 0
        %822 = vmatpush1.bf16.xpose.msra.mxu0 0
        %823 = vmatprep.subr.bf16.mxu0 0
        %824 = vmatpush1.bf16.xpose.msra.mxu0 0
        %825 = vmatprep.mubr.bf16.mxu0 0
        %826 = vmatmul.mubr.bf16.gmra.mrb[0].mxu0 %v788
        %v827 = vpop.f32.mrb[0].mxu0
        %v828 = vadd.f32 0.0, %v827
        %v829 = vpop.f32.mrb[0].mxu0
        %v830 = vpop.f32.mrb[0].mxu0
        %v831 = vpop.f32.mrb[0].mxu0
        %832 = vdwg.mxu0
        %v834 = vsel %vm786, %v783, 0
        %v837 = vsel %vm786, %v785, 0
        %839 = vmatprep.subr.bf16.mxu0 0
        %840 = vmatpush1.bf16.xpose.msra.mxu0 %v837
        %841 = vmatprep.subr.bf16.mxu0 0
        %842 = vmatpush1.bf16.xpose.msra.mxu0 0
        %843 = vmatprep.subr.bf16.mxu0 0
        %844 = vmatpush1.bf16.xpose.msra.mxu0 0
        %845 = vmatprep.subr.bf16.mxu0 0
        %846 = vmatpush1.bf16.xpose.msra.mxu0 0
        %847 = vmatprep.subr.bf16.mxu0 0
        %848 = vmatpush1.bf16.xpose.msra.mxu0 0
        %849 = vmatprep.subr.bf16.mxu0 0
        %850 = vmatpush1.bf16.xpose.msra.mxu0 0
        %851 = vmatprep.subr.bf16.mxu0 0
        %852 = vmatpush1.bf16.xpose.msra.mxu0 0
        %853 = vmatprep.subr.bf16.mxu0 0
        %854 = vmatpush1.bf16.xpose.msra.mxu0 0
        %855 = vmatprep.subr.bf16.mxu0 0
        %856 = vmatpush1.bf16.xpose.msra.mxu0 0
        %857 = vmatprep.subr.bf16.mxu0 0
        %858 = vmatpush1.bf16.xpose.msra.mxu0 0
        %859 = vmatprep.subr.bf16.mxu0 0
        %860 = vmatpush1.bf16.xpose.msra.mxu0 0
        %861 = vmatprep.subr.bf16.mxu0 0
        %862 = vmatpush1.bf16.xpose.msra.mxu0 0
        %863 = vmatprep.subr.bf16.mxu0 0
        %864 = vmatpush1.bf16.xpose.msra.mxu0 0
        %865 = vmatprep.subr.bf16.mxu0 0
        %866 = vmatpush1.bf16.xpose.msra.mxu0 0
        %867 = vmatprep.subr.bf16.mxu0 0
        %868 = vmatpush1.bf16.xpose.msra.mxu0 0
        %869 = vmatprep.subr.bf16.mxu0 0
        %870 = vmatpush1.bf16.xpose.msra.mxu0 0
        %871 = vmatprep.mubr.bf16.mxu0 0
        %872 = vmatmul.mubr.bf16.gmra.mrb[0].mxu0 %v834
        %v873 = vpop.f32.mrb[0].mxu0
        %v874 = vadd.f32 0.0, %v873
        %v875 = vpop.f32.mrb[0].mxu0
        %v876 = vpop.f32.mrb[0].mxu0
        %v877 = vpop.f32.mrb[0].mxu0
        %878 = vdwg.mxu0
        %v879 = vsel %vm786, %v828, -inf
        %880 = vmax.xlane.f32.xlu0 %v879
        %v881 = vpop.xlane.xlu0 %880
        %v882 = vsel %vm786, %v874, -inf
        %883 = vmax.xlane.f32.xlu0 %v882
        %v884 = vpop.xlane.xlu0 %883
        %v885 = vsub.f32 %v828, %v881
        %v886 = vsub.f32 %v874, %v884
        %v887 = vmul.f32 %v885, 1.442695
        %v888 = vpow.pop %v887
        %v889 = vmul.f32 %v886, 1.442695
        %v890 = vpow.pop %v889
        %v891 = vsel %vm786, %v888, 0.0
        %892 = vadd.xlane.f32.xlu0 %v891
        %v893 = vpop.xlane.xlu0 %892
        %v894 = vsel %vm786, %v890, 0.0
        %895 = vadd.xlane.f32.xlu0 %v894
        %v896 = vpop.xlane.xlu0 %895
        %v897 = vpack.c.bf16 %v888, %v888
        %v898 = vpack.c.bf16 %v890, %v890
        %v899 = vpack.c.bf16 %v774, %v774
        %v900 = vpack.c.bf16 %v777, %v777
        %v902 = vsel %vm786, %v897, 0
        %vm904 = vcmask 1043456
        %v906 = vsel %vm904, %v899, 0
        %908 = vmatprep.subr.bf16.mxu0 0
        %909 = vmatpush1.bf16.msra.mxu0 %v906
        %910 = vmatprep.subr.bf16.mxu0 0
        %911 = vmatpush1.bf16.msra.mxu0 0
        %912 = vmatprep.subr.bf16.mxu0 0
        %913 = vmatpush1.bf16.msra.mxu0 0
        %914 = vmatprep.subr.bf16.mxu0 0
        %915 = vmatpush1.bf16.msra.mxu0 0
        %916 = vmatprep.subr.bf16.mxu0 0
        %917 = vmatpush1.bf16.msra.mxu0 0
        %918 = vmatprep.subr.bf16.mxu0 0
        %919 = vmatpush1.bf16.msra.mxu0 0
        %920 = vmatprep.subr.bf16.mxu0 0
        %921 = vmatpush1.bf16.msra.mxu0 0
        %922 = vmatprep.subr.bf16.mxu0 0
        %923 = vmatpush1.bf16.msra.mxu0 0
        %924 = vmatprep.subr.bf16.mxu0 0
        %925 = vmatpush1.bf16.msra.mxu0 0
        %926 = vmatprep.subr.bf16.mxu0 0
        %927 = vmatpush1.bf16.msra.mxu0 0
        %928 = vmatprep.subr.bf16.mxu0 0
        %929 = vmatpush1.bf16.msra.mxu0 0
        %930 = vmatprep.subr.bf16.mxu0 0
        %931 = vmatpush1.bf16.msra.mxu0 0
        %932 = vmatprep.subr.bf16.mxu0 0
        %933 = vmatpush1.bf16.msra.mxu0 0
        %934 = vmatprep.subr.bf16.mxu0 0
        %935 = vmatpush1.bf16.msra.mxu0 0
        %936 = vmatprep.subr.bf16.mxu0 0
        %937 = vmatpush1.bf16.msra.mxu0 0
        %938 = vmatprep.subr.bf16.mxu0 0
        %939 = vmatpush1.bf16.msra.mxu0 0
        %940 = vmatprep.mubr.bf16.mxu0 0
        %941 = vmatmul.mubr.bf16.gmra.mrb[0].mxu0 %v902
        %v942 = vpop.f32.mrb[0].mxu0
        %v943 = vadd.f32 0.0, %v942
        %v944 = vpop.f32.mrb[0].mxu0
        %v945 = vpop.f32.mrb[0].mxu0
        %v946 = vpop.f32.mrb[0].mxu0
        %947 = vdwg.mxu0
        %v949 = vsel %vm786, %v898, 0
        %v952 = vsel %vm904, %v900, 0
        %954 = vmatprep.subr.bf16.mxu0 0
        %955 = vmatpush1.bf16.msra.mxu0 %v952
        %956 = vmatprep.subr.bf16.mxu0 0
        %957 = vmatpush1.bf16.msra.mxu0 0
        %958 = vmatprep.subr.bf16.mxu0 0
        %959 = vmatpush1.bf16.msra.mxu0 0
        %960 = vmatprep.subr.bf16.mxu0 0
        %961 = vmatpush1.bf16.msra.mxu0 0
        %962 = vmatprep.subr.bf16.mxu0 0
        %963 = vmatpush1.bf16.msra.mxu0 0
        %964 = vmatprep.subr.bf16.mxu0 0
        %965 = vmatpush1.bf16.msra.mxu0 0
        %966 = vmatprep.subr.bf16.mxu0 0
        %967 = vmatpush1.bf16.msra.mxu0 0
        %968 = vmatprep.subr.bf16.mxu0 0
        %969 = vmatpush1.bf16.msra.mxu0 0
        %970 = vmatprep.subr.bf16.mxu0 0
        %971 = vmatpush1.bf16.msra.mxu0 0
        %972 = vmatprep.subr.bf16.mxu0 0
        %973 = vmatpush1.bf16.msra.mxu0 0
        %974 = vmatprep.subr.bf16.mxu0 0
        %975 = vmatpush1.bf16.msra.mxu0 0
        %976 = vmatprep.subr.bf16.mxu0 0
        %977 = vmatpush1.bf16.msra.mxu0 0
        %978 = vmatprep.subr.bf16.mxu0 0
        %979 = vmatpush1.bf16.msra.mxu0 0
        %980 = vmatprep.subr.bf16.mxu0 0
        %981 = vmatpush1.bf16.msra.mxu0 0
        %982 = vmatprep.subr.bf16.mxu0 0
        %983 = vmatpush1.bf16.msra.mxu0 0
        %984 = vmatprep.subr.bf16.mxu0 0
        %985 = vmatpush1.bf16.msra.mxu0 0
        %986 = vmatprep.mubr.bf16.mxu0 0
        %987 = vmatmul.mubr.bf16.gmra.mrb[0].mxu0 %v949
        %v988 = vpop.f32.mrb[0].mxu0
        %v989 = vadd.f32 0.0, %v988
        %v990 = vpop.f32.mrb[0].mxu0
        %v991 = vpop.f32.mrb[0].mxu0
        %v992 = vpop.f32.mrb[0].mxu0
        %993 = vdwg.mxu0
        %v994 = vrcp.pop %v893
        %v995 = vrcp.pop %v896
        %v996 = vmul.f32 %v943, %v994
        %v997 = vmul.f32 %v989, %v995
        %v998 = vpack.c.bf16 %v997, %v996
        %v999 = vld [vmem:[%s554] sm:$0xf]
        %v1001 = vsel %vm786, %v998, 0
        %v1004 = vsel %vm904, %v999, 0
        %1006 = vmatprep.subr.bf16.mxu0 0
        %1007 = vmatpush1.bf16.msra.mxu0 %v1004
        %1008 = vmatprep.subr.bf16.mxu0 0
        %1009 = vmatpush1.bf16.msra.mxu0 0
        %1010 = vmatprep.subr.bf16.mxu0 0
        %1011 = vmatpush1.bf16.msra.mxu0 0
        %1012 = vmatprep.subr.bf16.mxu0 0
        %1013 = vmatpush1.bf16.msra.mxu0 0
        %1014 = vmatprep.subr.bf16.mxu0 0
        %1015 = vmatpush1.bf16.msra.mxu0 0
        %1016 = vmatprep.subr.bf16.mxu0 0
        %1017 = vmatpush1.bf16.msra.mxu0 0
        %1018 = vmatprep.subr.bf16.mxu0 0
        %1019 = vmatpush1.bf16.msra.mxu0 0
        %1020 = vmatprep.subr.bf16.mxu0 0
        %1021 = vmatpush1.bf16.msra.mxu0 0
        %1022 = vmatprep.subr.bf16.mxu0 0
        %1023 = vmatpush1.bf16.msra.mxu0 0
        %1024 = vmatprep.subr.bf16.mxu0 0
        %1025 = vmatpush1.bf16.msra.mxu0 0
        %1026 = vmatprep.subr.bf16.mxu0 0
        %1027 = vmatpush1.bf16.msra.mxu0 0
        %1028 = vmatprep.subr.bf16.mxu0 0
        %1029 = vmatpush1.bf16.msra.mxu0 0
        %1030 = vmatprep.subr.bf16.mxu0 0
        %1031 = vmatpush1.bf16.msra.mxu0 0
        %1032 = vmatprep.subr.bf16.mxu0 0
        %1033 = vmatpush1.bf16.msra.mxu0 0
        %1034 = vmatprep.subr.bf16.mxu0 0
        %1035 = vmatpush1.bf16.msra.mxu0 0
        %1036 = vmatprep.subr.bf16.mxu0 0
        %1037 = vmatpush1.bf16.msra.mxu0 0
        %1038 = vmatprep.mubr.bf16.mxu0 0
        %1039 = vmatmul.mubr.bf16.gmra.mrb[0].mxu0 %v1001
        %v1040 = vpop.f32.mrb[0].mxu0
        %v1041 = vadd.f32 0.0, %v1040
        %v1042 = vpop.f32.mrb[0].mxu0
        %v1043 = vpop.f32.mrb[0].mxu0
        %v1044 = vadd.f32 0.0, %v1043
        %v1045 = vpop.f32.mrb[0].mxu0
        %1046 = vdwg.mxu0
        %p1047 = scmp.eq.s32.totalorder %s28, 0
        // Predicated region
        $region65: #{tpu_custom_call.1} parent=63 // pred_check
          %p1048 = pneg %p1047
        $region66: #{tpu_custom_call.1} parent=63 // pred_check_branch
          %1050 = sbr.rel (%p1048) target = $region68
        $region67: #{tpu_custom_call.1} parent=63 // pred_region
          %v1051 = vld [vmem:[%s10] sm:$0x1]
          %v1053 = vlaneseq
          %v1054 = vshrl.u32 %v1053, 7
          %v1055 = vsub.s32 0, %v1054
          %v1056 = vrot.slane %v1051, %v1055
          %v1058 = vadd.f32 %v1041, %v1056
          %v1059 = vadd.f32 %v1044, %v1056
          %1060 = vst.msk [vmem:[#allocation2] sm:$0xff] %vm591, %v1058
          %1061 = vst.msk [vmem:[#allocation2 + $0x8] sm:$0xff] %vm591, %v1059
        $region68: #{tpu_custom_call.1} parent=63 // pred_fallthru
          _
        %p1062 = scmp.gt.s32.totalorder %s28, 0
        // Predicated region
        $region69: #{tpu_custom_call.1} parent=63 // pred_check
          %p1063 = pneg %p1062
        $region70: #{tpu_custom_call.1} parent=63 // pred_check_branch
          %1065 = sbr.rel (%p1063) target = $region72
        $region71: #{tpu_custom_call.1} parent=63 // pred_region
          %v1066 = vld [vmem:[#allocation2] sm:$0xff]
          %v1067 = vld [vmem:[#allocation2 + $0x8] sm:$0xff]
          %v1068 = vadd.f32 %v1066, %v1041
          %v1069 = vadd.f32 %v1067, %v1044
          %1070 = vst.msk [vmem:[#allocation2] sm:$0xff] %vm591, %v1068
          %1071 = vst.msk [vmem:[#allocation2 + $0x8] sm:$0xff] %vm591, %v1069
        $region72: #{tpu_custom_call.1} parent=63 // pred_fallthru
          _
        // Predicated region
        $region73: #{tpu_custom_call.1} parent=63 // pred_check
          %p1072 = pneg %p334
        $region74: #{tpu_custom_call.1} parent=63 // pred_check_branch
          %1074 = sbr.rel (%p1072) target = $region76
        $region75: #{tpu_custom_call.1} parent=63 // pred_region
          %s1075 = smul.u32 2, %s27
          %s1077 = ssub.s32 256, 256
          %1078 = vsyncadd [#allocation3], %s1077
          %s1079 = smul.addr %s1075, 128
          %s1080 = scalar_lea.hbm %s11, %s1079
          %s1081 = sshll.u32 [#allocation2], 4
          %s1082 = int_to_ptr.vmem [resolvable:$true] %s1081
          %1087 = dma.vmem_to_hbm [thread:$0]  %s1082, 256, %s1080, [#allocation3], 128, 128, 8
        $region76: #{tpu_custom_call.1} parent=63 // pred_fallthru
          _
        // Predicated region
        $region77: #{tpu_custom_call.1} parent=63 // pred_check
          %p1088 = pneg %p334
        $region78: #{tpu_custom_call.1} parent=63 // pred_check_branch
          %1090 = sbr.rel (%p1088) target = $region80
        $region79: #{tpu_custom_call.1} parent=63 // pred_region
          %1091 = dma.done [#allocation3], 256
        $region80: #{tpu_custom_call.1} parent=63 // pred_fallthru
          _
      $region64: #{tpu_custom_call.1} parent=5 // pred_fallthru
        _
      %p1092 = scmp.le.s32.totalorder 2, %s18
      // Predicated region
      $region81: #{tpu_custom_call.1} parent=5 // pred_check
        %p1093 = pneg %p1092
      $region82: #{tpu_custom_call.1} parent=5 // pred_check_branch
        %1095 = sbr.rel (%p1093) target = $region84
      $region83: #{tpu_custom_call.1} parent=5 // pred_region
        %s1096 = ssub.s32 %s18, 2
      $region84: #{tpu_custom_call.1} parent=5 // pred_fallthru
        _
    $region6: #{tpu_custom_call.1} parent=1 // loop_footer
      %s22 = sadd.s32 1, %s18
    $region7: #{tpu_custom_call.1} parent=1 // loop_footer_branch
      %17 = sbr.rel target = $region3
    $region8: #{tpu_custom_call.1} parent=1 // loop_exit
      _
    %1097 = vsyncpa [#allocation3], 1
    %s1098 = scalar_lea.sflag [#allocation3], 1
    %1099 = vsyncpa %s1098, 1

</llo_original>
